<compile_context>
chip_gen: v5e
topology: v5e:2x2
jax: 0.10.0
libtpu: 0.0.40
codegen_flags: <defaults>
</compile_context>

<pallas_src>
import functools

import jax
import jax.numpy as jnp
from jax.experimental import pallas as pl
from jax.experimental.pallas import tpu as pltpu

KH = KW = 3  # 3x3 conv


def _relu_conv3x3_kernel(x_ref, w_ref, o_ref, y_ref, *, wp, cout):
    # x_ref: (1, Cin, S)        one batch element, spatially zero-padded + flattened
    # w_ref: (KH*KW*Cout, Cin)  tap-major / output-channel-minor weight rows
    # o_ref: (1, Cout, S)       conv result on the padded grid (border discarded later)
    # y_ref: VMEM scratch (KH*KW*Cout, S)
    s = o_ref.shape[-1]

    # Fused ReLU (zero padding is ReLU-invariant, so relu-then-pad == pad-then-relu).
    x = jnp.maximum(x_ref[0], 0.0)                                  # (Cin, S)

    # One wide MXU matmul covering all 9 taps at once (N = 256 lanes, M = 288 rows).
    y_ref[...] = jnp.dot(w_ref[...], x, preferred_element_type=jnp.float32)

    acc = jnp.zeros((cout, s), jnp.float32)
    for ky in range(KH):
        for kx in range(KW):
            tap = ky * KW + kx
            off = (ky - 1) * wp + (kx - 1)                          # flat spatial shift of tap
            y_tap = y_ref[tap * cout:(tap + 1) * cout, :]           # aligned (Cout, S) slice
            # acc[:, r] += y_tap[:, r + off]; wrapped lanes only land in the
            # padding border, which is discarded by the wrapper.
            acc = acc + pltpu.roll(y_tap, shift=(-off) % s, axis=1)

    o_ref[0] = acc.astype(o_ref.dtype)


def relu_conv2d(x_nchw, w_oihw):
    """x_nchw: (N, Cin, H, W); w_oihw: (Cout, Cin, 3, 3). Returns (N, Cout, H, W)."""
    N, Cin, H, W = x_nchw.shape
    Cout = w_oihw.shape[0]
    Hp, Wp = H + 2, W + 2
    S = Hp * Wp

    # Minimal wrapper glue (no activation transposes): zero-pad the spatial dims
    # and flatten them -> (N, Cin, Hp*Wp).
    x_pad = jnp.pad(x_nchw, ((0, 0), (0, 0), (1, 1), (1, 1))).reshape(N, Cin, S)
    # Weight prep (tiny, done once): (Cout, Cin, KH, KW) -> (KH*KW*Cout, Cin),
    # row index = tap*Cout + co with tap = ky*KW + kx.
    w2t = jnp.transpose(w_oihw, (2, 3, 0, 1)).reshape(KH * KW * Cout, Cin)

    kernel = functools.partial(_relu_conv3x3_kernel, wp=Wp, cout=Cout)

    out_flat = pl.pallas_call(
        kernel,
        out_shape=jax.ShapeDtypeStruct((N, Cout, S), x_nchw.dtype),
        grid=(N,),
        in_specs=[
            pl.BlockSpec((1, Cin, S), lambda n: (n, 0, 0)),
            pl.BlockSpec((KH * KW * Cout, Cin), lambda n: (0, 0)),  # weights stay resident
        ],
        out_specs=pl.BlockSpec((1, Cout, S), lambda n: (n, 0, 0)),
        scratch_shapes=[pltpu.VMEM((KH * KW * Cout, S), jnp.float32)],
        compiler_params=pltpu.CompilerParams(
            dimension_semantics=("parallel",)),
    )(x_pad, w2t)

    # Drop the 1-pixel border of the padded output grid -> (N, Cout, H, W).
    return out_flat.reshape(N, Cout, Hp, Wp)[:, :, 1:1 + H, 1:1 + W]


if __name__ == "__main__":
    key = jax.random.PRNGKey(0)
    kx_key, kw_key = jax.random.split(key)

    # Shapes implied by the module: x (1, 128, 14, 14), weight (32, 128, 3, 3).
    N, Cin, H, W = 1, 128, 14, 14
    Cout = 32

    x = jax.random.normal(kx_key, (N, Cin, H, W), dtype=jnp.float32)
    # Deterministic synthetic weights (kaiming-like scale).
    w = jax.random.normal(kw_key, (Cout, Cin, KH, KW), dtype=jnp.float32) * (
        2.0 / (Cin * KH * KW)) ** 0.5

    fwd = jax.jit(relu_conv2d)
    out = jax.block_until_ready(fwd(x, w))
    assert out.shape == (N, Cout, H, W), out.shape

    # Reference check against XLA conv (relu then conv, padding=1, no bias).
    ref = jax.lax.conv_general_dilated(
        jnp.maximum(x, 0.0), w,
        window_strides=(1, 1), padding=((1, 1), (1, 1)),
        dimension_numbers=("NCHW", "OIHW", "NCHW"))
    assert jnp.allclose(out, ref, rtol=1e-3, atol=1e-3), float(
        jnp.max(jnp.abs(out - ref)))

    print("KERNEL_OK")
</pallas_src>

<mosaic_0001>
module attributes {stable_mosaic.version = 11 : i64} {
  func.func @_relu_conv3x3_kernel(%arg0: i32, %arg1: memref<1x128x256xf32, #tpu.memory_space<vmem>>, %arg2: memref<288x128xf32, #tpu.memory_space<vmem>>, %arg3: memref<1x32x256xf32, #tpu.memory_space<vmem>>, %arg4: memref<288x256xf32, #tpu.memory_space<vmem>>) attributes {dimension_semantics = [#tpu.dimension_semantics<parallel>], iteration_bounds = array<i64: 1>, scalar_prefetch = 0 : i64, scratch_operands = 1 : i64, tpu.core_type = #tpu.core_type<tc>, window_params = [{transform_indices = @transform_0, window_bounds = array<i64: 1, 128, 256>}, {pipeline_mode = #tpu.pipeline_mode<synchronous>, transform_indices = @transform_1, window_bounds = array<i64: 288, 128>}, {transform_indices = @transform_2, window_bounds = array<i64: 1, 32, 256>}]} {
    %c0 = arith.constant 0 : index
    %c0_0 = arith.constant 0 : index
    %c0_1 = arith.constant 0 : index
    %0 = vector.load %arg1[%c0, %c0_0, %c0_1] : memref<1x128x256xf32, #tpu.memory_space<vmem>>, vector<1x128x256xf32>
    %1 = vector.shape_cast %0 : vector<1x128x256xf32> to vector<128x256xf32>
    %cst = arith.constant 0.000000e+00 : f32
    %2 = vector.broadcast %cst : f32 to vector<128x256xf32>
    %3 = arith.maximumf %1, %2 : vector<128x256xf32>
    %c0_2 = arith.constant 0 : index
    %c0_3 = arith.constant 0 : index
    %4 = vector.load %arg2[%c0_2, %c0_3] : memref<288x128xf32, #tpu.memory_space<vmem>>, vector<288x128xf32>
    %cst_4 = arith.constant dense<0.000000e+00> : vector<288x256xf32>
    %5 = tpu.matmul %4, %3, %cst_4 {dimension_numbers = #tpu.dot_dimension_numbers<[1], [0], [0], [1], [0, 0, 1, 1], [], []>} : vector<288x128xf32>, vector<128x256xf32>, vector<288x256xf32> -> vector<288x256xf32>
    %c0_5 = arith.constant 0 : index
    %c0_6 = arith.constant 0 : index
    %6 = vector.load %arg4[%c0_5, %c0_6] : memref<288x256xf32, #tpu.memory_space<vmem>>, vector<288x256xf32>
    tpu.vector_store %arg4[%c0_5, %c0_6], %5 {strides = array<i32>} : memref<288x256xf32, #tpu.memory_space<vmem>>, vector<288x256xf32>,
    %cst_7 = arith.constant 0.000000e+00 : f32
    %7 = vector.broadcast %cst_7 : f32 to vector<32x256xf32>
    %c0_8 = arith.constant 0 : index
    %c0_9 = arith.constant 0 : index
    %8 = vector.load %arg4[%c0_8, %c0_9] : memref<288x256xf32, #tpu.memory_space<vmem>>, vector<32x256xf32>
    %c17_i32 = arith.constant 17 : i32
    %9 = tpu.dynamic_rotate %8 by %c17_i32 dim 1 : vector<32x256xf32>, i32 -> vector<32x256xf32>
    %10 = arith.addf %7, %9 : vector<32x256xf32>
    %c32 = arith.constant 32 : index
    %c0_10 = arith.constant 0 : index
    %11 = vector.load %arg4[%c32, %c0_10] : memref<288x256xf32, #tpu.memory_space<vmem>>, vector<32x256xf32>
    %c16_i32 = arith.constant 16 : i32
    %12 = tpu.dynamic_rotate %11 by %c16_i32 dim 1 : vector<32x256xf32>, i32 -> vector<32x256xf32>
    %13 = arith.addf %10, %12 : vector<32x256xf32>
    %c64 = arith.constant 64 : index
    %c0_11 = arith.constant 0 : index
    %14 = vector.load %arg4[%c64, %c0_11] : memref<288x256xf32, #tpu.memory_space<vmem>>, vector<32x256xf32>
    %c15_i32 = arith.constant 15 : i32
    %15 = tpu.dynamic_rotate %14 by %c15_i32 dim 1 : vector<32x256xf32>, i32 -> vector<32x256xf32>
    %16 = arith.addf %13, %15 : vector<32x256xf32>
    %c96 = arith.constant 96 : index
    %c0_12 = arith.constant 0 : index
    %17 = vector.load %arg4[%c96, %c0_12] : memref<288x256xf32, #tpu.memory_space<vmem>>, vector<32x256xf32>
    %c1_i32 = arith.constant 1 : i32
    %18 = tpu.dynamic_rotate %17 by %c1_i32 dim 1 : vector<32x256xf32>, i32 -> vector<32x256xf32>
    %19 = arith.addf %16, %18 : vector<32x256xf32>
    %c128 = arith.constant 128 : index
    %c0_13 = arith.constant 0 : index
    %20 = vector.load %arg4[%c128, %c0_13] : memref<288x256xf32, #tpu.memory_space<vmem>>, vector<32x256xf32>
    %c0_i32 = arith.constant 0 : i32
    %21 = tpu.dynamic_rotate %20 by %c0_i32 dim 1 : vector<32x256xf32>, i32 -> vector<32x256xf32>
    %22 = arith.addf %19, %21 : vector<32x256xf32>
    %c160 = arith.constant 160 : index
    %c0_14 = arith.constant 0 : index
    %23 = vector.load %arg4[%c160, %c0_14] : memref<288x256xf32, #tpu.memory_space<vmem>>, vector<32x256xf32>
    %c255_i32 = arith.constant 255 : i32
    %24 = tpu.dynamic_rotate %23 by %c255_i32 dim 1 : vector<32x256xf32>, i32 -> vector<32x256xf32>
    %25 = arith.addf %22, %24 : vector<32x256xf32>
    %c192 = arith.constant 192 : index
    %c0_15 = arith.constant 0 : index
    %26 = vector.load %arg4[%c192, %c0_15] : memref<288x256xf32, #tpu.memory_space<vmem>>, vector<32x256xf32>
    %c241_i32 = arith.constant 241 : i32
    %27 = tpu.dynamic_rotate %26 by %c241_i32 dim 1 : vector<32x256xf32>, i32 -> vector<32x256xf32>
    %28 = arith.addf %25, %27 : vector<32x256xf32>
    %c224 = arith.constant 224 : index
    %c0_16 = arith.constant 0 : index
    %29 = vector.load %arg4[%c224, %c0_16] : memref<288x256xf32, #tpu.memory_space<vmem>>, vector<32x256xf32>
    %c240_i32 = arith.constant 240 : i32
    %30 = tpu.dynamic_rotate %29 by %c240_i32 dim 1 : vector<32x256xf32>, i32 -> vector<32x256xf32>
    %31 = arith.addf %28, %30 : vector<32x256xf32>
    %c256 = arith.constant 256 : index
    %c0_17 = arith.constant 0 : index
    %32 = vector.load %arg4[%c256, %c0_17] : memref<288x256xf32, #tpu.memory_space<vmem>>, vector<32x256xf32>
    %c239_i32 = arith.constant 239 : i32
    %33 = tpu.dynamic_rotate %32 by %c239_i32 dim 1 : vector<32x256xf32>, i32 -> vector<32x256xf32>
    %34 = arith.addf %31, %33 : vector<32x256xf32>
    %c0_18 = arith.constant 0 : index
    %c0_19 = arith.constant 0 : index
    %c0_20 = arith.constant 0 : index
    %35 = vector.load %arg3[%c0_18, %c0_19, %c0_20] : memref<1x32x256xf32, #tpu.memory_space<vmem>>, vector<1x32x256xf32>
    %36 = vector.shape_cast %35 : vector<1x32x256xf32> to vector<32x256xf32>
    %37 = vector.shape_cast %34 : vector<32x256xf32> to vector<1x32x256xf32>
    tpu.vector_store %arg3[%c0_18, %c0_19, %c0_20], %37 {strides = array<i32>} : memref<1x32x256xf32, #tpu.memory_space<vmem>>, vector<1x32x256xf32>,
    return
  }
  func.func @transform_0(%arg0: i32) -> (i32, i32, i32) {
    %c0_i32 = arith.constant 0 : i32
    %c0_i32_0 = arith.constant 0 : i32
    %c0_i32_1 = arith.constant 0 : i32
    return %arg0, %c0_i32, %c0_i32_0 : i32, i32, i32
  }
  func.func @transform_1(%arg0: i32) -> (i32, i32) {
    %c0_i32 = arith.constant 0 : i32
    %c0_i32_0 = arith.constant 0 : i32
    %c0_i32_1 = arith.constant 0 : i32
    return %c0_i32, %c0_i32_0 : i32, i32
  }
  func.func @transform_2(%arg0: i32) -> (i32, i32, i32) {
    %c0_i32 = arith.constant 0 : i32
    %c0_i32_0 = arith.constant 0 : i32
    %c0_i32_1 = arith.constant 0 : i32
    return %arg0, %c0_i32, %c0_i32_0 : i32, i32, i32
  }
}

</mosaic_0001>

<llo_original>
// kernel: relu_conv2d.1
$region0: #{relu_conv2d.1}
  #allocation0 [shape = 'u32[]', space=smem, size = 0x4, offset = 0x4, fixed_abs, tag = 'smem constant byte address 0x4 - core index']
  #allocation1 [shape = 'u32[72,128]{1,0:T(1,128)}', space=vmem, size = 0x9000, scoped, tag = 'internal scratch']
  #allocation2 [shape = 'f32[288,256]{1,0:T(8,128)}', space=vmem, size = 0x48000, scoped, tag = 'scratch operand']
  %s0 = inlined_call_operand.vmem [shape: f32[1,128,256], index: 0, kind: input, shape index: {}]
  %s1 = inlined_call_operand.vmem [shape: f32[288,128], index: 1, kind: input, shape index: {}]
  %s2 = inlined_call_operand.vmem [shape: f32[1,32,256], index: 2, kind: output, shape index: {}]
  %s3 = sld [smem:[#allocation0]]
  $region18: #{relu_conv2d.1} parent=0
    _
  %s5 = ssub.s32 1, %s3
  %s6 = scalar_select 0, %s5, %s3
  // Predicated region
  $region2: #{relu_conv2d.1} parent=0 // pred_check
    _
  $region3: #{relu_conv2d.1} parent=0 // pred_check_branch
    %8 = sbr.rel (0) target = $region5
  $region4: #{relu_conv2d.1} parent=0 // pred_region
    _
  $region5: #{relu_conv2d.1} parent=0 // pred_fallthru
    _
  // Predicated region
  $region6: #{relu_conv2d.1} parent=0 // pred_check
    _
  $region7: #{relu_conv2d.1} parent=0 // pred_check_branch
    %10 = sbr.rel (0) target = $region9
  $region8: #{relu_conv2d.1} parent=0 // pred_region
    _
  $region9: #{relu_conv2d.1} parent=0 // pred_fallthru
    _
  %v11 = vld [vmem:[%s0] sm:$0xff]
  %v12 = vld [vmem:[%s0 + $0x8] sm:$0xff]
  %v13 = vld [vmem:[%s0 + $0x10] sm:$0xff]
  %v14 = vld [vmem:[%s0 + $0x18] sm:$0xff]
  %v15 = vld [vmem:[%s0 + $0x20] sm:$0xff]
  %v16 = vld [vmem:[%s0 + $0x28] sm:$0xff]
  %v17 = vld [vmem:[%s0 + $0x30] sm:$0xff]
  %v18 = vld [vmem:[%s0 + $0x38] sm:$0xff]
  %v19 = vld [vmem:[%s0 + $0x40] sm:$0xff]
  %v20 = vld [vmem:[%s0 + $0x48] sm:$0xff]
  %v21 = vld [vmem:[%s0 + $0x50] sm:$0xff]
  %v22 = vld [vmem:[%s0 + $0x58] sm:$0xff]
  %v23 = vld [vmem:[%s0 + $0x60] sm:$0xff]
  %v24 = vld [vmem:[%s0 + $0x68] sm:$0xff]
  %v25 = vld [vmem:[%s0 + $0x70] sm:$0xff]
  %v26 = vld [vmem:[%s0 + $0x78] sm:$0xff]
  %v27 = vld [vmem:[%s0 + $0x80] sm:$0xff]
  %v28 = vld [vmem:[%s0 + $0x88] sm:$0xff]
  %v29 = vld [vmem:[%s0 + $0x90] sm:$0xff]
  %v30 = vld [vmem:[%s0 + $0x98] sm:$0xff]
  %v31 = vld [vmem:[%s0 + $0xa0] sm:$0xff]
  %v32 = vld [vmem:[%s0 + $0xa8] sm:$0xff]
  %v33 = vld [vmem:[%s0 + $0xb0] sm:$0xff]
  %v34 = vld [vmem:[%s0 + $0xb8] sm:$0xff]
  %v35 = vld [vmem:[%s0 + $0xc0] sm:$0xff]
  %v36 = vld [vmem:[%s0 + $0xc8] sm:$0xff]
  %v37 = vld [vmem:[%s0 + $0xd0] sm:$0xff]
  %v38 = vld [vmem:[%s0 + $0xd8] sm:$0xff]
  %v39 = vld [vmem:[%s0 + $0xe0] sm:$0xff]
  %v40 = vld [vmem:[%s0 + $0xe8] sm:$0xff]
  %v41 = vld [vmem:[%s0 + $0xf0] sm:$0xff]
  %v42 = vld [vmem:[%s0 + $0xf8] sm:$0xff]
  %v43 = vmax.f32 %v11, 0.0
  %v44 = vmax.f32 %v12, 0.0
  %v45 = vmax.f32 %v13, 0.0
  %v46 = vmax.f32 %v14, 0.0
  %v47 = vmax.f32 %v15, 0.0
  %v48 = vmax.f32 %v16, 0.0
  %v49 = vmax.f32 %v17, 0.0
  %v50 = vmax.f32 %v18, 0.0
  %v51 = vmax.f32 %v19, 0.0
  %v52 = vmax.f32 %v20, 0.0
  %v53 = vmax.f32 %v21, 0.0
  %v54 = vmax.f32 %v22, 0.0
  %v55 = vmax.f32 %v23, 0.0
  %v56 = vmax.f32 %v24, 0.0
  %v57 = vmax.f32 %v25, 0.0
  %v58 = vmax.f32 %v26, 0.0
  %v59 = vmax.f32 %v27, 0.0
  %v60 = vmax.f32 %v28, 0.0
  %v61 = vmax.f32 %v29, 0.0
  %v62 = vmax.f32 %v30, 0.0
  %v63 = vmax.f32 %v31, 0.0
  %v64 = vmax.f32 %v32, 0.0
  %v65 = vmax.f32 %v33, 0.0
  %v66 = vmax.f32 %v34, 0.0
  %v67 = vmax.f32 %v35, 0.0
  %v68 = vmax.f32 %v36, 0.0
  %v69 = vmax.f32 %v37, 0.0
  %v70 = vmax.f32 %v38, 0.0
  %v71 = vmax.f32 %v39, 0.0
  %v72 = vmax.f32 %v40, 0.0
  %v73 = vmax.f32 %v41, 0.0
  %v74 = vmax.f32 %v42, 0.0
  %v75 = vld [vmem:[%s1] sm:$0xff]
  %v76 = vld [vmem:[%s1 + $0x8] sm:$0xff]
  %v77 = vld [vmem:[%s1 + $0x10] sm:$0xff]
  %v78 = vld [vmem:[%s1 + $0x18] sm:$0xff]
  %v79 = vld [vmem:[%s1 + $0x20] sm:$0xff]
  %v80 = vld [vmem:[%s1 + $0x28] sm:$0xff]
  %v81 = vld [vmem:[%s1 + $0x30] sm:$0xff]
  %v82 = vld [vmem:[%s1 + $0x38] sm:$0xff]
  %v83 = vld [vmem:[%s1 + $0x40] sm:$0xff]
  %v84 = vld [vmem:[%s1 + $0x48] sm:$0xff]
  %v85 = vld [vmem:[%s1 + $0x50] sm:$0xff]
  %v86 = vld [vmem:[%s1 + $0x58] sm:$0xff]
  %v87 = vld [vmem:[%s1 + $0x60] sm:$0xff]
  %v88 = vld [vmem:[%s1 + $0x68] sm:$0xff]
  %v89 = vld [vmem:[%s1 + $0x70] sm:$0xff]
  %v90 = vld [vmem:[%s1 + $0x78] sm:$0xff]
  %v91 = vld [vmem:[%s1 + $0x80] sm:$0xff]
  %v92 = vld [vmem:[%s1 + $0x88] sm:$0xff]
  %v93 = vld [vmem:[%s1 + $0x90] sm:$0xff]
  %v94 = vld [vmem:[%s1 + $0x98] sm:$0xff]
  %v95 = vld [vmem:[%s1 + $0xa0] sm:$0xff]
  %v96 = vld [vmem:[%s1 + $0xa8] sm:$0xff]
  %v97 = vld [vmem:[%s1 + $0xb0] sm:$0xff]
  %v98 = vld [vmem:[%s1 + $0xb8] sm:$0xff]
  %v99 = vld [vmem:[%s1 + $0xc0] sm:$0xff]
  %v100 = vld [vmem:[%s1 + $0xc8] sm:$0xff]
  %v101 = vld [vmem:[%s1 + $0xd0] sm:$0xff]
  %v102 = vld [vmem:[%s1 + $0xd8] sm:$0xff]
  %v103 = vld [vmem:[%s1 + $0xe0] sm:$0xff]
  %v104 = vld [vmem:[%s1 + $0xe8] sm:$0xff]
  %v105 = vld [vmem:[%s1 + $0xf0] sm:$0xff]
  %v106 = vld [vmem:[%s1 + $0xf8] sm:$0xff]
  %v107 = vld [vmem:[%s1 + $0x100] sm:$0xff]
  %v108 = vld [vmem:[%s1 + $0x108] sm:$0xff]
  %v109 = vld [vmem:[%s1 + $0x110] sm:$0xff]
  %v110 = vld [vmem:[%s1 + $0x118] sm:$0xff]
  %111 = vmatpush.msra.mxu0 %v73
  %112 = vmatpush.msra.mxu0 %v71
  %113 = vmatpush.msra.mxu0 %v69
  %114 = vmatpush.msra.mxu0 %v67
  %115 = vmatpush.msra.mxu0 %v65
  %116 = vmatpush.msra.mxu0 %v63
  %117 = vmatpush.msra.mxu0 %v61
  %118 = vmatpush.msra.mxu0 %v59
  %119 = vmatpush.msra.mxu0 %v57
  %120 = vmatpush.msra.mxu0 %v55
  %121 = vmatpush.msra.mxu0 %v53
  %122 = vmatpush.msra.mxu0 %v51
  %123 = vmatpush.msra.mxu0 %v49
  %124 = vmatpush.msra.mxu0 %v47
  %125 = vmatpush.msra.mxu0 %v45
  %126 = vmatpush.msra.mxu0 %v43
  %127 = vmatmul.f32.gmra.mxu0 %v75
  %v128 = vpop.f32.mrf.mxu0
  %v129 = vadd.f32 0.0, %v128
  %130 = vmatmul.f32.gmra.mxu0 %v76
  %v131 = vpop.f32.mrf.mxu0
  %v132 = vadd.f32 0.0, %v131
  %133 = vmatmul.f32.gmra.mxu0 %v77
  %v134 = vpop.f32.mrf.mxu0
  %v135 = vadd.f32 0.0, %v134
  %136 = vmatmul.f32.gmra.mxu0 %v78
  %v137 = vpop.f32.mrf.mxu0
  %v138 = vadd.f32 0.0, %v137
  %139 = vmatmul.f32.gmra.mxu0 %v79
  %v140 = vpop.f32.mrf.mxu0
  %v141 = vadd.f32 0.0, %v140
  %142 = vmatmul.f32.gmra.mxu0 %v80
  %v143 = vpop.f32.mrf.mxu0
  %v144 = vadd.f32 0.0, %v143
  %145 = vmatmul.f32.gmra.mxu0 %v81
  %v146 = vpop.f32.mrf.mxu0
  %v147 = vadd.f32 0.0, %v146
  %148 = vmatmul.f32.gmra.mxu0 %v82
  %v149 = vpop.f32.mrf.mxu0
  %v150 = vadd.f32 0.0, %v149
  %151 = vmatmul.f32.gmra.mxu0 %v83
  %v152 = vpop.f32.mrf.mxu0
  %v153 = vadd.f32 0.0, %v152
  %154 = vmatmul.f32.gmra.mxu0 %v84
  %v155 = vpop.f32.mrf.mxu0
  %v156 = vadd.f32 0.0, %v155
  %157 = vmatmul.f32.gmra.mxu0 %v85
  %v158 = vpop.f32.mrf.mxu0
  %v159 = vadd.f32 0.0, %v158
  %160 = vmatmul.f32.gmra.mxu0 %v86
  %v161 = vpop.f32.mrf.mxu0
  %v162 = vadd.f32 0.0, %v161
  %163 = vmatmul.f32.gmra.mxu0 %v87
  %v164 = vpop.f32.mrf.mxu0
  %v165 = vadd.f32 0.0, %v164
  %166 = vmatmul.f32.gmra.mxu0 %v88
  %v167 = vpop.f32.mrf.mxu0
  %v168 = vadd.f32 0.0, %v167
  %169 = vmatmul.f32.gmra.mxu0 %v89
  %v170 = vpop.f32.mrf.mxu0
  %v171 = vadd.f32 0.0, %v170
  %172 = vmatmul.f32.gmra.mxu0 %v90
  %v173 = vpop.f32.mrf.mxu0
  %v174 = vadd.f32 0.0, %v173
  %175 = vmatmul.f32.gmra.mxu0 %v91
  %v176 = vpop.f32.mrf.mxu0
  %v177 = vadd.f32 0.0, %v176
  %178 = vmatmul.f32.gmra.mxu0 %v92
  %v179 = vpop.f32.mrf.mxu0
  %v180 = vadd.f32 0.0, %v179
  %181 = vmatmul.f32.gmra.mxu0 %v93
  %v182 = vpop.f32.mrf.mxu0
  %v183 = vadd.f32 0.0, %v182
  %184 = vmatmul.f32.gmra.mxu0 %v94
  %v185 = vpop.f32.mrf.mxu0
  %v186 = vadd.f32 0.0, %v185
  %187 = vmatmul.f32.gmra.mxu0 %v95
  %v188 = vpop.f32.mrf.mxu0
  %v189 = vadd.f32 0.0, %v188
  %190 = vmatmul.f32.gmra.mxu0 %v96
  %v191 = vpop.f32.mrf.mxu0
  %v192 = vadd.f32 0.0, %v191
  %193 = vmatmul.f32.gmra.mxu0 %v97
  %v194 = vpop.f32.mrf.mxu0
  %v195 = vadd.f32 0.0, %v194
  %196 = vmatmul.f32.gmra.mxu0 %v98
  %v197 = vpop.f32.mrf.mxu0
  %v198 = vadd.f32 0.0, %v197
  %199 = vmatmul.f32.gmra.mxu0 %v99
  %v200 = vpop.f32.mrf.mxu0
  %v201 = vadd.f32 0.0, %v200
  %202 = vmatmul.f32.gmra.mxu0 %v100
  %v203 = vpop.f32.mrf.mxu0
  %v204 = vadd.f32 0.0, %v203
  %205 = vmatmul.f32.gmra.mxu0 %v101
  %v206 = vpop.f32.mrf.mxu0
  %v207 = vadd.f32 0.0, %v206
  %208 = vmatmul.f32.gmra.mxu0 %v102
  %v209 = vpop.f32.mrf.mxu0
  %v210 = vadd.f32 0.0, %v209
  %211 = vmatmul.f32.gmra.mxu0 %v103
  %v212 = vpop.f32.mrf.mxu0
  %v213 = vadd.f32 0.0, %v212
  %214 = vmatmul.f32.gmra.mxu0 %v104
  %v215 = vpop.f32.mrf.mxu0
  %v216 = vadd.f32 0.0, %v215
  %217 = vmatmul.f32.gmra.mxu0 %v105
  %v218 = vpop.f32.mrf.mxu0
  %v219 = vadd.f32 0.0, %v218
  %220 = vmatmul.f32.gmra.mxu0 %v106
  %v221 = vpop.f32.mrf.mxu0
  %v222 = vadd.f32 0.0, %v221
  %223 = vmatmul.f32.gmra.mxu0 %v107
  %v224 = vpop.f32.mrf.mxu0
  %v225 = vadd.f32 0.0, %v224
  %226 = vmatmul.f32.gmra.mxu0 %v108
  %v227 = vpop.f32.mrf.mxu0
  %v228 = vadd.f32 0.0, %v227
  %229 = vmatmul.f32.gmra.mxu0 %v109
  %v230 = vpop.f32.mrf.mxu0
  %v231 = vadd.f32 0.0, %v230
  %232 = vmatmul.f32.gmra.mxu0 %v110
  %v233 = vpop.f32.mrf.mxu0
  %v234 = vadd.f32 0.0, %v233
  %235 = vdwg.mxu0
  %236 = vmatpush.msra.mxu0 %v74
  %237 = vmatpush.msra.mxu0 %v72
  %238 = vmatpush.msra.mxu0 %v70
  %239 = vmatpush.msra.mxu0 %v68
  %240 = vmatpush.msra.mxu0 %v66
  %241 = vmatpush.msra.mxu0 %v64
  %242 = vmatpush.msra.mxu0 %v62
  %243 = vmatpush.msra.mxu0 %v60
  %244 = vmatpush.msra.mxu0 %v58
  %245 = vmatpush.msra.mxu0 %v56
  %246 = vmatpush.msra.mxu0 %v54
  %247 = vmatpush.msra.mxu0 %v52
  %248 = vmatpush.msra.mxu0 %v50
  %249 = vmatpush.msra.mxu0 %v48
  %250 = vmatpush.msra.mxu0 %v46
  %251 = vmatpush.msra.mxu0 %v44
  %252 = vmatmul.f32.gmra.mxu0 %v75
  %v253 = vpop.f32.mrf.mxu0
  %v254 = vadd.f32 0.0, %v253
  %255 = vmatmul.f32.gmra.mxu0 %v76
  %v256 = vpop.f32.mrf.mxu0
  %v257 = vadd.f32 0.0, %v256
  %258 = vmatmul.f32.gmra.mxu0 %v77
  %v259 = vpop.f32.mrf.mxu0
  %v260 = vadd.f32 0.0, %v259
  %261 = vmatmul.f32.gmra.mxu0 %v78
  %v262 = vpop.f32.mrf.mxu0
  %v263 = vadd.f32 0.0, %v262
  %264 = vmatmul.f32.gmra.mxu0 %v79
  %v265 = vpop.f32.mrf.mxu0
  %v266 = vadd.f32 0.0, %v265
  %267 = vmatmul.f32.gmra.mxu0 %v80
  %v268 = vpop.f32.mrf.mxu0
  %v269 = vadd.f32 0.0, %v268
  %270 = vmatmul.f32.gmra.mxu0 %v81
  %v271 = vpop.f32.mrf.mxu0
  %v272 = vadd.f32 0.0, %v271
  %273 = vmatmul.f32.gmra.mxu0 %v82
  %v274 = vpop.f32.mrf.mxu0
  %v275 = vadd.f32 0.0, %v274
  %276 = vmatmul.f32.gmra.mxu0 %v83
  %v277 = vpop.f32.mrf.mxu0
  %v278 = vadd.f32 0.0, %v277
  %279 = vmatmul.f32.gmra.mxu0 %v84
  %v280 = vpop.f32.mrf.mxu0
  %v281 = vadd.f32 0.0, %v280
  %282 = vmatmul.f32.gmra.mxu0 %v85
  %v283 = vpop.f32.mrf.mxu0
  %v284 = vadd.f32 0.0, %v283
  %285 = vmatmul.f32.gmra.mxu0 %v86
  %v286 = vpop.f32.mrf.mxu0
  %v287 = vadd.f32 0.0, %v286
  %288 = vmatmul.f32.gmra.mxu0 %v87
  %v289 = vpop.f32.mrf.mxu0
  %v290 = vadd.f32 0.0, %v289
  %291 = vmatmul.f32.gmra.mxu0 %v88
  %v292 = vpop.f32.mrf.mxu0
  %v293 = vadd.f32 0.0, %v292
  %294 = vmatmul.f32.gmra.mxu0 %v89
  %v295 = vpop.f32.mrf.mxu0
  %v296 = vadd.f32 0.0, %v295
  %297 = vmatmul.f32.gmra.mxu0 %v90
  %v298 = vpop.f32.mrf.mxu0
  %v299 = vadd.f32 0.0, %v298
  %300 = vmatmul.f32.gmra.mxu0 %v91
  %v301 = vpop.f32.mrf.mxu0
  %v302 = vadd.f32 0.0, %v301
  %303 = vmatmul.f32.gmra.mxu0 %v92
  %v304 = vpop.f32.mrf.mxu0
  %v305 = vadd.f32 0.0, %v304
  %306 = vmatmul.f32.gmra.mxu0 %v93
  %v307 = vpop.f32.mrf.mxu0
  %v308 = vadd.f32 0.0, %v307
  %309 = vmatmul.f32.gmra.mxu0 %v94
  %v310 = vpop.f32.mrf.mxu0
  %v311 = vadd.f32 0.0, %v310
  %312 = vmatmul.f32.gmra.mxu0 %v95
  %v313 = vpop.f32.mrf.mxu0
  %v314 = vadd.f32 0.0, %v313
  %315 = vmatmul.f32.gmra.mxu0 %v96
  %v316 = vpop.f32.mrf.mxu0
  %v317 = vadd.f32 0.0, %v316
  %318 = vmatmul.f32.gmra.mxu0 %v97
  %v319 = vpop.f32.mrf.mxu0
  %v320 = vadd.f32 0.0, %v319
  %321 = vmatmul.f32.gmra.mxu0 %v98
  %v322 = vpop.f32.mrf.mxu0
  %v323 = vadd.f32 0.0, %v322
  %324 = vmatmul.f32.gmra.mxu0 %v99
  %v325 = vpop.f32.mrf.mxu0
  %v326 = vadd.f32 0.0, %v325
  %327 = vmatmul.f32.gmra.mxu0 %v100
  %v328 = vpop.f32.mrf.mxu0
  %v329 = vadd.f32 0.0, %v328
  %330 = vmatmul.f32.gmra.mxu0 %v101
  %v331 = vpop.f32.mrf.mxu0
  %v332 = vadd.f32 0.0, %v331
  %333 = vmatmul.f32.gmra.mxu0 %v102
  %v334 = vpop.f32.mrf.mxu0
  %v335 = vadd.f32 0.0, %v334
  %336 = vmatmul.f32.gmra.mxu0 %v103
  %v337 = vpop.f32.mrf.mxu0
  %v338 = vadd.f32 0.0, %v337
  %339 = vmatmul.f32.gmra.mxu0 %v104
  %v340 = vpop.f32.mrf.mxu0
  %v341 = vadd.f32 0.0, %v340
  %342 = vmatmul.f32.gmra.mxu0 %v105
  %v343 = vpop.f32.mrf.mxu0
  %v344 = vadd.f32 0.0, %v343
  %345 = vmatmul.f32.gmra.mxu0 %v106
  %v346 = vpop.f32.mrf.mxu0
  %v347 = vadd.f32 0.0, %v346
  %348 = vmatmul.f32.gmra.mxu0 %v107
  %v349 = vpop.f32.mrf.mxu0
  %v350 = vadd.f32 0.0, %v349
  %351 = vmatmul.f32.gmra.mxu0 %v108
  %v352 = vpop.f32.mrf.mxu0
  %v353 = vadd.f32 0.0, %v352
  %354 = vmatmul.f32.gmra.mxu0 %v109
  %v355 = vpop.f32.mrf.mxu0
  %v356 = vadd.f32 0.0, %v355
  %357 = vmatmul.f32.gmra.mxu0 %v110
  %v358 = vpop.f32.mrf.mxu0
  %v359 = vadd.f32 0.0, %v358
  %360 = vdwg.mxu0
  %361 = vst [vmem:[#allocation2] sm:$0xff] %v129
  %362 = vst [vmem:[#allocation2 + $0x8] sm:$0xff] %v254
  %363 = vst [vmem:[#allocation2 + $0x10] sm:$0xff] %v132
  %364 = vst [vmem:[#allocation2 + $0x18] sm:$0xff] %v257
  %365 = vst [vmem:[#allocation2 + $0x20] sm:$0xff] %v135
  %366 = vst [vmem:[#allocation2 + $0x28] sm:$0xff] %v260
  %367 = vst [vmem:[#allocation2 + $0x30] sm:$0xff] %v138
  %368 = vst [vmem:[#allocation2 + $0x38] sm:$0xff] %v263
  %369 = vst [vmem:[#allocation2 + $0x40] sm:$0xff] %v141
  %370 = vst [vmem:[#allocation2 + $0x48] sm:$0xff] %v266
  %371 = vst [vmem:[#allocation2 + $0x50] sm:$0xff] %v144
  %372 = vst [vmem:[#allocation2 + $0x58] sm:$0xff] %v269
  %373 = vst [vmem:[#allocation2 + $0x60] sm:$0xff] %v147
  %374 = vst [vmem:[#allocation2 + $0x68] sm:$0xff] %v272
  %375 = vst [vmem:[#allocation2 + $0x70] sm:$0xff] %v150
  %376 = vst [vmem:[#allocation2 + $0x78] sm:$0xff] %v275
  %377 = vst [vmem:[#allocation2 + $0x80] sm:$0xff] %v153
  %378 = vst [vmem:[#allocation2 + $0x88] sm:$0xff] %v278
  %379 = vst [vmem:[#allocation2 + $0x90] sm:$0xff] %v156
  %380 = vst [vmem:[#allocation2 + $0x98] sm:$0xff] %v281
  %381 = vst [vmem:[#allocation2 + $0xa0] sm:$0xff] %v159
  %382 = vst [vmem:[#allocation2 + $0xa8] sm:$0xff] %v284
  %383 = vst [vmem:[#allocation2 + $0xb0] sm:$0xff] %v162
  %384 = vst [vmem:[#allocation2 + $0xb8] sm:$0xff] %v287
  %385 = vst [vmem:[#allocation2 + $0xc0] sm:$0xff] %v165
  %386 = vst [vmem:[#allocation2 + $0xc8] sm:$0xff] %v290
  %387 = vst [vmem:[#allocation2 + $0xd0] sm:$0xff] %v168
  %388 = vst [vmem:[#allocation2 + $0xd8] sm:$0xff] %v293
  %389 = vst [vmem:[#allocation2 + $0xe0] sm:$0xff] %v171
  %390 = vst [vmem:[#allocation2 + $0xe8] sm:$0xff] %v296
  %391 = vst [vmem:[#allocation2 + $0xf0] sm:$0xff] %v174
  %392 = vst [vmem:[#allocation2 + $0xf8] sm:$0xff] %v299
  %393 = vst [vmem:[#allocation2 + $0x100] sm:$0xff] %v177
  %394 = vst [vmem:[#allocation2 + $0x108] sm:$0xff] %v302
  %395 = vst [vmem:[#allocation2 + $0x110] sm:$0xff] %v180
  %396 = vst [vmem:[#allocation2 + $0x118] sm:$0xff] %v305
  %397 = vst [vmem:[#allocation2 + $0x120] sm:$0xff] %v183
  %398 = vst [vmem:[#allocation2 + $0x128] sm:$0xff] %v308
  %399 = vst [vmem:[#allocation2 + $0x130] sm:$0xff] %v186
  %400 = vst [vmem:[#allocation2 + $0x138] sm:$0xff] %v311
  %401 = vst [vmem:[#allocation2 + $0x140] sm:$0xff] %v189
  %402 = vst [vmem:[#allocation2 + $0x148] sm:$0xff] %v314
  %403 = vst [vmem:[#allocation2 + $0x150] sm:$0xff] %v192
  %404 = vst [vmem:[#allocation2 + $0x158] sm:$0xff] %v317
  %405 = vst [vmem:[#allocation2 + $0x160] sm:$0xff] %v195
  %406 = vst [vmem:[#allocation2 + $0x168] sm:$0xff] %v320
  %407 = vst [vmem:[#allocation2 + $0x170] sm:$0xff] %v198
  %408 = vst [vmem:[#allocation2 + $0x178] sm:$0xff] %v323
  %409 = vst [vmem:[#allocation2 + $0x180] sm:$0xff] %v201
  %410 = vst [vmem:[#allocation2 + $0x188] sm:$0xff] %v326
  %411 = vst [vmem:[#allocation2 + $0x190] sm:$0xff] %v204
  %412 = vst [vmem:[#allocation2 + $0x198] sm:$0xff] %v329
  %413 = vst [vmem:[#allocation2 + $0x1a0] sm:$0xff] %v207
  %414 = vst [vmem:[#allocation2 + $0x1a8] sm:$0xff] %v332
  %415 = vst [vmem:[#allocation2 + $0x1b0] sm:$0xff] %v210
  %416 = vst [vmem:[#allocation2 + $0x1b8] sm:$0xff] %v335
  %417 = vst [vmem:[#allocation2 + $0x1c0] sm:$0xff] %v213
  %418 = vst [vmem:[#allocation2 + $0x1c8] sm:$0xff] %v338
  %419 = vst [vmem:[#allocation2 + $0x1d0] sm:$0xff] %v216
  %420 = vst [vmem:[#allocation2 + $0x1d8] sm:$0xff] %v341
  %421 = vst [vmem:[#allocation2 + $0x1e0] sm:$0xff] %v219
  %422 = vst [vmem:[#allocation2 + $0x1e8] sm:$0xff] %v344
  %423 = vst [vmem:[#allocation2 + $0x1f0] sm:$0xff] %v222
  %424 = vst [vmem:[#allocation2 + $0x1f8] sm:$0xff] %v347
  %425 = vst [vmem:[#allocation2 + $0x200] sm:$0xff] %v225
  %426 = vst [vmem:[#allocation2 + $0x208] sm:$0xff] %v350
  %427 = vst [vmem:[#allocation2 + $0x210] sm:$0xff] %v228
  %428 = vst [vmem:[#allocation2 + $0x218] sm:$0xff] %v353
  %429 = vst [vmem:[#allocation2 + $0x220] sm:$0xff] %v231
  %430 = vst [vmem:[#allocation2 + $0x228] sm:$0xff] %v356
  %431 = vst [vmem:[#allocation2 + $0x230] sm:$0xff] %v234
  %432 = vst [vmem:[#allocation2 + $0x238] sm:$0xff] %v359
  %v433 = vld [vmem:[#allocation2] sm:$0xff]
  %v434 = vld [vmem:[#allocation2 + $0x8] sm:$0xff]
  %v435 = vld [vmem:[#allocation2 + $0x10] sm:$0xff]
  %v436 = vld [vmem:[#allocation2 + $0x18] sm:$0xff]
  %v437 = vld [vmem:[#allocation2 + $0x20] sm:$0xff]
  %v438 = vld [vmem:[#allocation2 + $0x28] sm:$0xff]
  %v439 = vld [vmem:[#allocation2 + $0x30] sm:$0xff]
  %v440 = vld [vmem:[#allocation2 + $0x38] sm:$0xff]
  %441 = vrot.lane.b32.xlu0 %v433, 17
  %v442 = vpop.permute.xlu0 %441
  %443 = vrot.lane.b32.xlu0 %v435, 17
  %v444 = vpop.permute.xlu0 %443
  %445 = vrot.lane.b32.xlu0 %v437, 17
  %v446 = vpop.permute.xlu0 %445
  %447 = vrot.lane.b32.xlu0 %v439, 17
  %v448 = vpop.permute.xlu0 %447
  %449 = vrot.lane.b32.xlu0 %v434, 17
  %v450 = vpop.permute.xlu0 %449
  %451 = vrot.lane.b32.xlu0 %v436, 17
  %v452 = vpop.permute.xlu0 %451
  %453 = vrot.lane.b32.xlu0 %v438, 17
  %v454 = vpop.permute.xlu0 %453
  %455 = vrot.lane.b32.xlu0 %v440, 17
  %v456 = vpop.permute.xlu0 %455
  %v457 = vlaneseq
  %v458 = vand.u32 %v457, 127
  %vm459 = vcmp.lt.s32.totalorder %v458, 17
  %v460 = vsel %vm459, %v442, %v450
  %v461 = vsel %vm459, %v444, %v452
  %v462 = vsel %vm459, %v446, %v454
  %v463 = vsel %vm459, %v448, %v456
  %v464 = vsel %vm459, %v450, %v442
  %v465 = vsel %vm459, %v452, %v444
  %v466 = vsel %vm459, %v454, %v446
  %v467 = vsel %vm459, %v456, %v448
  %v468 = vadd.f32 %v464, 0.0
  %v469 = vadd.f32 %v460, 0.0
  %v470 = vadd.f32 %v465, 0.0
  %v471 = vadd.f32 %v461, 0.0
  %v472 = vadd.f32 %v466, 0.0
  %v473 = vadd.f32 %v462, 0.0
  %v474 = vadd.f32 %v467, 0.0
  %v475 = vadd.f32 %v463, 0.0
  %v476 = vld [vmem:[#allocation2 + $0x40] sm:$0xff]
  %v477 = vld [vmem:[#allocation2 + $0x48] sm:$0xff]
  %v478 = vld [vmem:[#allocation2 + $0x50] sm:$0xff]
  %v479 = vld [vmem:[#allocation2 + $0x58] sm:$0xff]
  %v480 = vld [vmem:[#allocation2 + $0x60] sm:$0xff]
  %v481 = vld [vmem:[#allocation2 + $0x68] sm:$0xff]
  %v482 = vld [vmem:[#allocation2 + $0x70] sm:$0xff]
  %v483 = vld [vmem:[#allocation2 + $0x78] sm:$0xff]
  %484 = vrot.lane.b32.xlu0 %v476, 16
  %v485 = vpop.permute.xlu0 %484
  %486 = vrot.lane.b32.xlu0 %v478, 16
  %v487 = vpop.permute.xlu0 %486
  %488 = vrot.lane.b32.xlu0 %v480, 16
  %v489 = vpop.permute.xlu0 %488
  %490 = vrot.lane.b32.xlu0 %v482, 16
  %v491 = vpop.permute.xlu0 %490
  %492 = vrot.lane.b32.xlu0 %v477, 16
  %v493 = vpop.permute.xlu0 %492
  %494 = vrot.lane.b32.xlu0 %v479, 16
  %v495 = vpop.permute.xlu0 %494
  %496 = vrot.lane.b32.xlu0 %v481, 16
  %v497 = vpop.permute.xlu0 %496
  %498 = vrot.lane.b32.xlu0 %v483, 16
  %v499 = vpop.permute.xlu0 %498
  %vm500 = vcmp.lt.s32.totalorder %v458, 16
  %v501 = vsel %vm500, %v485, %v493
  %v502 = vsel %vm500, %v487, %v495
  %v503 = vsel %vm500, %v489, %v497
  %v504 = vsel %vm500, %v491, %v499
  %v505 = vsel %vm500, %v493, %v485
  %v506 = vsel %vm500, %v495, %v487
  %v507 = vsel %vm500, %v497, %v489
  %v508 = vsel %vm500, %v499, %v491
  %v509 = vadd.f32 %v468, %v505
  %v510 = vadd.f32 %v469, %v501
  %v511 = vadd.f32 %v470, %v506
  %v512 = vadd.f32 %v471, %v502
  %v513 = vadd.f32 %v472, %v507
  %v514 = vadd.f32 %v473, %v503
  %v515 = vadd.f32 %v474, %v508
  %v516 = vadd.f32 %v475, %v504
  %v517 = vld [vmem:[#allocation2 + $0x80] sm:$0xff]
  %v518 = vld [vmem:[#allocation2 + $0x88] sm:$0xff]
  %v519 = vld [vmem:[#allocation2 + $0x90] sm:$0xff]
  %v520 = vld [vmem:[#allocation2 + $0x98] sm:$0xff]
  %v521 = vld [vmem:[#allocation2 + $0xa0] sm:$0xff]
  %v522 = vld [vmem:[#allocation2 + $0xa8] sm:$0xff]
  %v523 = vld [vmem:[#allocation2 + $0xb0] sm:$0xff]
  %v524 = vld [vmem:[#allocation2 + $0xb8] sm:$0xff]
  %525 = vrot.lane.b32.xlu0 %v517, 15
  %v526 = vpop.permute.xlu0 %525
  %527 = vrot.lane.b32.xlu0 %v519, 15
  %v528 = vpop.permute.xlu0 %527
  %529 = vrot.lane.b32.xlu0 %v521, 15
  %v530 = vpop.permute.xlu0 %529
  %531 = vrot.lane.b32.xlu0 %v523, 15
  %v532 = vpop.permute.xlu0 %531
  %533 = vrot.lane.b32.xlu0 %v518, 15
  %v534 = vpop.permute.xlu0 %533
  %535 = vrot.lane.b32.xlu0 %v520, 15
  %v536 = vpop.permute.xlu0 %535
  %537 = vrot.lane.b32.xlu0 %v522, 15
  %v538 = vpop.permute.xlu0 %537
  %539 = vrot.lane.b32.xlu0 %v524, 15
  %v540 = vpop.permute.xlu0 %539
  %vm541 = vcmp.lt.s32.totalorder %v458, 15
  %v542 = vsel %vm541, %v526, %v534
  %v543 = vsel %vm541, %v528, %v536
  %v544 = vsel %vm541, %v530, %v538
  %v545 = vsel %vm541, %v532, %v540
  %v546 = vsel %vm541, %v534, %v526
  %v547 = vsel %vm541, %v536, %v528
  %v548 = vsel %vm541, %v538, %v530
  %v549 = vsel %vm541, %v540, %v532
  %v550 = vadd.f32 %v509, %v546
  %v551 = vadd.f32 %v510, %v542
  %v552 = vadd.f32 %v511, %v547
  %v553 = vadd.f32 %v512, %v543
  %v554 = vadd.f32 %v513, %v548
  %v555 = vadd.f32 %v514, %v544
  %v556 = vadd.f32 %v515, %v549
  %v557 = vadd.f32 %v516, %v545
  %v558 = vld [vmem:[#allocation2 + $0xc0] sm:$0xff]
  %v559 = vld [vmem:[#allocation2 + $0xc8] sm:$0xff]
  %v560 = vld [vmem:[#allocation2 + $0xd0] sm:$0xff]
  %v561 = vld [vmem:[#allocation2 + $0xd8] sm:$0xff]
  %v562 = vld [vmem:[#allocation2 + $0xe0] sm:$0xff]
  %v563 = vld [vmem:[#allocation2 + $0xe8] sm:$0xff]
  %v564 = vld [vmem:[#allocation2 + $0xf0] sm:$0xff]
  %v565 = vld [vmem:[#allocation2 + $0xf8] sm:$0xff]
  %566 = vrot.lane.b32.xlu0 %v558, 1
  %v567 = vpop.permute.xlu0 %566
  %568 = vrot.lane.b32.xlu0 %v560, 1
  %v569 = vpop.permute.xlu0 %568
  %570 = vrot.lane.b32.xlu0 %v562, 1
  %v571 = vpop.permute.xlu0 %570
  %572 = vrot.lane.b32.xlu0 %v564, 1
  %v573 = vpop.permute.xlu0 %572
  %574 = vrot.lane.b32.xlu0 %v559, 1
  %v575 = vpop.permute.xlu0 %574
  %576 = vrot.lane.b32.xlu0 %v561, 1
  %v577 = vpop.permute.xlu0 %576
  %578 = vrot.lane.b32.xlu0 %v563, 1
  %v579 = vpop.permute.xlu0 %578
  %580 = vrot.lane.b32.xlu0 %v565, 1
  %v581 = vpop.permute.xlu0 %580
  %vm582 = vcmp.lt.s32.totalorder %v458, 1
  %v583 = vsel %vm582, %v567, %v575
  %v584 = vsel %vm582, %v569, %v577
  %v585 = vsel %vm582, %v571, %v579
  %v586 = vsel %vm582, %v573, %v581
  %v587 = vsel %vm582, %v575, %v567
  %v588 = vsel %vm582, %v577, %v569
  %v589 = vsel %vm582, %v579, %v571
  %v590 = vsel %vm582, %v581, %v573
  %v591 = vadd.f32 %v550, %v587
  %v592 = vadd.f32 %v551, %v583
  %v593 = vadd.f32 %v552, %v588
  %v594 = vadd.f32 %v553, %v584
  %v595 = vadd.f32 %v554, %v589
  %v596 = vadd.f32 %v555, %v585
  %v597 = vadd.f32 %v556, %v590
  %v598 = vadd.f32 %v557, %v586
  %v599 = vld [vmem:[#allocation2 + $0x100] sm:$0xff]
  %v600 = vld [vmem:[#allocation2 + $0x108] sm:$0xff]
  %v601 = vld [vmem:[#allocation2 + $0x110] sm:$0xff]
  %v602 = vld [vmem:[#allocation2 + $0x118] sm:$0xff]
  %v603 = vld [vmem:[#allocation2 + $0x120] sm:$0xff]
  %v604 = vld [vmem:[#allocation2 + $0x128] sm:$0xff]
  %v605 = vld [vmem:[#allocation2 + $0x130] sm:$0xff]
  %v606 = vld [vmem:[#allocation2 + $0x138] sm:$0xff]
  %v607 = vadd.f32 %v591, %v599
  %v608 = vadd.f32 %v592, %v600
  %v609 = vadd.f32 %v593, %v601
  %v610 = vadd.f32 %v594, %v602
  %v611 = vadd.f32 %v595, %v603
  %v612 = vadd.f32 %v596, %v604
  %v613 = vadd.f32 %v597, %v605
  %v614 = vadd.f32 %v598, %v606
  %v615 = vld [vmem:[#allocation2 + $0x140] sm:$0xff]
  %v616 = vld [vmem:[#allocation2 + $0x148] sm:$0xff]
  %v617 = vld [vmem:[#allocation2 + $0x150] sm:$0xff]
  %v618 = vld [vmem:[#allocation2 + $0x158] sm:$0xff]
  %v619 = vld [vmem:[#allocation2 + $0x160] sm:$0xff]
  %v620 = vld [vmem:[#allocation2 + $0x168] sm:$0xff]
  %v621 = vld [vmem:[#allocation2 + $0x170] sm:$0xff]
  %v622 = vld [vmem:[#allocation2 + $0x178] sm:$0xff]
  %623 = vrot.lane.b32.xlu0 %v615, 127
  %v624 = vpop.permute.xlu0 %623
  %625 = vrot.lane.b32.xlu0 %v617, 127
  %v626 = vpop.permute.xlu0 %625
  %627 = vrot.lane.b32.xlu0 %v619, 127
  %v628 = vpop.permute.xlu0 %627
  %629 = vrot.lane.b32.xlu0 %v621, 127
  %v630 = vpop.permute.xlu0 %629
  %631 = vrot.lane.b32.xlu0 %v616, 127
  %v632 = vpop.permute.xlu0 %631
  %633 = vrot.lane.b32.xlu0 %v618, 127
  %v634 = vpop.permute.xlu0 %633
  %635 = vrot.lane.b32.xlu0 %v620, 127
  %v636 = vpop.permute.xlu0 %635
  %637 = vrot.lane.b32.xlu0 %v622, 127
  %v638 = vpop.permute.xlu0 %637
  %vm639 = vcmp.lt.s32.totalorder %v458, 127
  %v640 = vsel %vm639, %v624, %v632
  %v641 = vsel %vm639, %v626, %v634
  %v642 = vsel %vm639, %v628, %v636
  %v643 = vsel %vm639, %v630, %v638
  %v644 = vsel %vm639, %v632, %v624
  %v645 = vsel %vm639, %v634, %v626
  %v646 = vsel %vm639, %v636, %v628
  %v647 = vsel %vm639, %v638, %v630
  %v648 = vadd.f32 %v607, %v640
  %v649 = vadd.f32 %v608, %v644
  %v650 = vadd.f32 %v609, %v641
  %v651 = vadd.f32 %v610, %v645
  %v652 = vadd.f32 %v611, %v642
  %v653 = vadd.f32 %v612, %v646
  %v654 = vadd.f32 %v613, %v643
  %v655 = vadd.f32 %v614, %v647
  %v656 = vld [vmem:[#allocation2 + $0x180] sm:$0xff]
  %v657 = vld [vmem:[#allocation2 + $0x188] sm:$0xff]
  %v658 = vld [vmem:[#allocation2 + $0x190] sm:$0xff]
  %v659 = vld [vmem:[#allocation2 + $0x198] sm:$0xff]
  %v660 = vld [vmem:[#allocation2 + $0x1a0] sm:$0xff]
  %v661 = vld [vmem:[#allocation2 + $0x1a8] sm:$0xff]
  %v662 = vld [vmem:[#allocation2 + $0x1b0] sm:$0xff]
  %v663 = vld [vmem:[#allocation2 + $0x1b8] sm:$0xff]
  %664 = vrot.lane.b32.xlu0 %v656, 113
  %v665 = vpop.permute.xlu0 %664
  %666 = vrot.lane.b32.xlu0 %v658, 113
  %v667 = vpop.permute.xlu0 %666
  %668 = vrot.lane.b32.xlu0 %v660, 113
  %v669 = vpop.permute.xlu0 %668
  %670 = vrot.lane.b32.xlu0 %v662, 113
  %v671 = vpop.permute.xlu0 %670
  %672 = vrot.lane.b32.xlu0 %v657, 113
  %v673 = vpop.permute.xlu0 %672
  %674 = vrot.lane.b32.xlu0 %v659, 113
  %v675 = vpop.permute.xlu0 %674
  %676 = vrot.lane.b32.xlu0 %v661, 113
  %v677 = vpop.permute.xlu0 %676
  %678 = vrot.lane.b32.xlu0 %v663, 113
  %v679 = vpop.permute.xlu0 %678
  %vm680 = vcmp.lt.s32.totalorder %v458, 113
  %v681 = vsel %vm680, %v665, %v673
  %v682 = vsel %vm680, %v667, %v675
  %v683 = vsel %vm680, %v669, %v677
  %v684 = vsel %vm680, %v671, %v679
  %v685 = vsel %vm680, %v673, %v665
  %v686 = vsel %vm680, %v675, %v667
  %v687 = vsel %vm680, %v677, %v669
  %v688 = vsel %vm680, %v679, %v671
  %v689 = vadd.f32 %v648, %v681
  %v690 = vadd.f32 %v649, %v685
  %v691 = vadd.f32 %v650, %v682
  %v692 = vadd.f32 %v651, %v686
  %v693 = vadd.f32 %v652, %v683
  %v694 = vadd.f32 %v653, %v687
  %v695 = vadd.f32 %v654, %v684
  %v696 = vadd.f32 %v655, %v688
  %v697 = vld [vmem:[#allocation2 + $0x1c0] sm:$0xff]
  %v698 = vld [vmem:[#allocation2 + $0x1c8] sm:$0xff]
  %v699 = vld [vmem:[#allocation2 + $0x1d0] sm:$0xff]
  %v700 = vld [vmem:[#allocation2 + $0x1d8] sm:$0xff]
  %v701 = vld [vmem:[#allocation2 + $0x1e0] sm:$0xff]
  %v702 = vld [vmem:[#allocation2 + $0x1e8] sm:$0xff]
  %v703 = vld [vmem:[#allocation2 + $0x1f0] sm:$0xff]
  %v704 = vld [vmem:[#allocation2 + $0x1f8] sm:$0xff]
  %705 = vrot.lane.b32.xlu0 %v697, 112
  %v706 = vpop.permute.xlu0 %705
  %707 = vrot.lane.b32.xlu0 %v699, 112
  %v708 = vpop.permute.xlu0 %707
  %709 = vrot.lane.b32.xlu0 %v701, 112
  %v710 = vpop.permute.xlu0 %709
  %711 = vrot.lane.b32.xlu0 %v703, 112
  %v712 = vpop.permute.xlu0 %711
  %713 = vrot.lane.b32.xlu0 %v698, 112
  %v714 = vpop.permute.xlu0 %713
  %715 = vrot.lane.b32.xlu0 %v700, 112
  %v716 = vpop.permute.xlu0 %715
  %717 = vrot.lane.b32.xlu0 %v702, 112
  %v718 = vpop.permute.xlu0 %717
  %719 = vrot.lane.b32.xlu0 %v704, 112
  %v720 = vpop.permute.xlu0 %719
  %vm721 = vcmp.lt.s32.totalorder %v458, 112
  %v722 = vsel %vm721, %v706, %v714
  %v723 = vsel %vm721, %v708, %v716
  %v724 = vsel %vm721, %v710, %v718
  %v725 = vsel %vm721, %v712, %v720
  %v726 = vsel %vm721, %v714, %v706
  %v727 = vsel %vm721, %v716, %v708
  %v728 = vsel %vm721, %v718, %v710
  %v729 = vsel %vm721, %v720, %v712
  %v730 = vadd.f32 %v689, %v722
  %v731 = vadd.f32 %v690, %v726
  %v732 = vadd.f32 %v691, %v723
  %v733 = vadd.f32 %v692, %v727
  %v734 = vadd.f32 %v693, %v724
  %v735 = vadd.f32 %v694, %v728
  %v736 = vadd.f32 %v695, %v725
  %v737 = vadd.f32 %v696, %v729
  %v738 = vld [vmem:[#allocation2 + $0x200] sm:$0xff]
  %v739 = vld [vmem:[#allocation2 + $0x208] sm:$0xff]
  %v740 = vld [vmem:[#allocation2 + $0x210] sm:$0xff]
  %v741 = vld [vmem:[#allocation2 + $0x218] sm:$0xff]
  %v742 = vld [vmem:[#allocation2 + $0x220] sm:$0xff]
  %v743 = vld [vmem:[#allocation2 + $0x228] sm:$0xff]
  %v744 = vld [vmem:[#allocation2 + $0x230] sm:$0xff]
  %v745 = vld [vmem:[#allocation2 + $0x238] sm:$0xff]
  %746 = vrot.lane.b32.xlu0 %v738, 111
  %v747 = vpop.permute.xlu0 %746
  %748 = vrot.lane.b32.xlu0 %v740, 111
  %v749 = vpop.permute.xlu0 %748
  %750 = vrot.lane.b32.xlu0 %v742, 111
  %v751 = vpop.permute.xlu0 %750
  %752 = vrot.lane.b32.xlu0 %v744, 111
  %v753 = vpop.permute.xlu0 %752
  %754 = vrot.lane.b32.xlu0 %v739, 111
  %v755 = vpop.permute.xlu0 %754
  %756 = vrot.lane.b32.xlu0 %v741, 111
  %v757 = vpop.permute.xlu0 %756
  %758 = vrot.lane.b32.xlu0 %v743, 111
  %v759 = vpop.permute.xlu0 %758
  %760 = vrot.lane.b32.xlu0 %v745, 111
  %v761 = vpop.permute.xlu0 %760
  %vm762 = vcmp.lt.s32.totalorder %v458, 111
  %v763 = vsel %vm762, %v747, %v755
  %v764 = vsel %vm762, %v749, %v757
  %v765 = vsel %vm762, %v751, %v759
  %v766 = vsel %vm762, %v753, %v761
  %v767 = vsel %vm762, %v755, %v747
  %v768 = vsel %vm762, %v757, %v749
  %v769 = vsel %vm762, %v759, %v751
  %v770 = vsel %vm762, %v761, %v753
  %v771 = vadd.f32 %v730, %v763
  %v772 = vadd.f32 %v731, %v767
  %v773 = vadd.f32 %v732, %v764
  %v774 = vadd.f32 %v733, %v768
  %v775 = vadd.f32 %v734, %v765
  %v776 = vadd.f32 %v735, %v769
  %v777 = vadd.f32 %v736, %v766
  %v778 = vadd.f32 %v737, %v770
  %779 = vst [vmem:[%s2] sm:$0xff] %v771
  %780 = vst [vmem:[%s2 + $0x8] sm:$0xff] %v772
  %781 = vst [vmem:[%s2 + $0x10] sm:$0xff] %v773
  %782 = vst [vmem:[%s2 + $0x18] sm:$0xff] %v774
  %783 = vst [vmem:[%s2 + $0x20] sm:$0xff] %v775
  %784 = vst [vmem:[%s2 + $0x28] sm:$0xff] %v776
  %785 = vst [vmem:[%s2 + $0x30] sm:$0xff] %v777
  %786 = vst [vmem:[%s2 + $0x38] sm:$0xff] %v778
  // Predicated region
  $region10: #{relu_conv2d.1} parent=0 // pred_check
    _
  $region11: #{relu_conv2d.1} parent=0 // pred_check_branch
    %788 = sbr.rel (0) target = $region13
  $region12: #{relu_conv2d.1} parent=0 // pred_region
    _
  $region13: #{relu_conv2d.1} parent=0 // pred_fallthru
    _
  // Predicated region
  $region14: #{relu_conv2d.1} parent=0 // pred_check
    _
  $region15: #{relu_conv2d.1} parent=0 // pred_check_branch
    %790 = sbr.rel (0) target = $region17
  $region16: #{relu_conv2d.1} parent=0 // pred_region
    _
  $region17: #{relu_conv2d.1} parent=0 // pred_fallthru
    _

</llo_original>
